<compile_context>
chip_gen: v7x
topology: tpu7x:2x2x1
jax: 0.10.0
libtpu: 0.0.40
codegen_flags: <defaults>
</compile_context>

<pallas_src>
import math

import jax
import jax.numpy as jnp
from jax.experimental import pallas as pl
from jax.experimental.pallas import tpu as pltpu


def _round_up(x, m):
    return ((x + m - 1) // m) * m


def _mlp_kernel(x_ref, w1_ref, b1_ref, w2_ref, b2_ref, o_ref, acc_ref):
    """Grid: (row tiles [parallel], hidden chunks [arbitrary / reduction]).

    x_ref:  (tm, D_in)        row tile of the flattened input
    w1_ref: (D_in, th)        fc1 weight chunk (hidden columns)
    b1_ref: (1, th)           fc1 bias chunk
    w2_ref: (th, D_out)       fc2 weight chunk (hidden rows)
    b2_ref: (1, D_out)        fc2 bias (whole)
    acc_ref:(tm, D_out) f32   accumulator scratch, persistent across h steps
    """
    h_idx = pl.program_id(1)

    # Fold fc2 bias into the accumulator init (drops a finalize-time VPU add).
    @pl.when(h_idx == 0)
    def _():
        acc_ref[...] = jnp.broadcast_to(
            b2_ref[...].astype(jnp.float32), acc_ref.shape)

    # fc1 on this hidden chunk: native-dtype MXU operands, f32 accumulation.
    h = jnp.dot(x_ref[...], w1_ref[...], preferred_element_type=jnp.float32)
    h = h + b1_ref[...].astype(jnp.float32)

    # Exact (erf) GELU in f32 — matches torch.nn.GELU() default.
    h = 0.5 * h * (1.0 + jax.lax.erf(h * jnp.float32(1.0 / math.sqrt(2.0))))

    # Dropout -> identity (eval mode).
    # TODO(synk): training-mode stochastic dropout (pltpu.prng_random_bits).

    # fc2 partial product for this hidden chunk, accumulated in f32 scratch.
    acc_ref[...] += jnp.dot(h.astype(w2_ref.dtype), w2_ref[...],
                            preferred_element_type=jnp.float32)

    @pl.when(h_idx == pl.num_programs(1) - 1)
    def _():
        o_ref[...] = acc_ref[...].astype(o_ref.dtype)


def _default_vmem_limit():
    # ~85% of physical per-core VMEM: ~54 MiB on v7x (64 MiB/TC),
    # ~109 MiB on v5e/v6e (128 MiB).  Fallback is safe on every generation.
    try:
        cap = getattr(pltpu.get_tpu_info(), "vmem_capacity_bytes", None)
        if cap:
            return int(cap * 0.85)
    except Exception:
        pass
    return 48 * 1024 * 1024


def mlp_pallas(x, w1, b1, w2, b2, *, tm=512, th=512, hidden_tile=None,
               vmem_limit_bytes=None):
    """y = fc2(gelu(fc1(x)))  (dropout = identity / eval mode).

    x: (..., D_in); w1: (D_in, D_hid); b1: (D_hid,);
    w2: (D_hid, D_out); b2: (D_out,).
    """
    D_in = x.shape[-1]
    D_hid = w1.shape[1]
    D_out = w2.shape[1]
    lead_shape = x.shape[:-1]
    M = math.prod(lead_shape) if lead_shape else 1
    x2d = x.reshape(M, D_in)

    x_isz = jnp.dtype(x.dtype).itemsize
    w_isz = jnp.dtype(w1.dtype).itemsize
    sublane = max(8, 32 // x_isz)            # 8 (f32) / 16 (bf16) / 32 (int8)

    if vmem_limit_bytes is None:
        vmem_limit_bytes = _default_vmem_limit()
    budget = int(0.70 * vmem_limit_bytes)    # headroom for Mosaic internals

    # ---- row tile ----------------------------------------------------------
    M_pad = _round_up(M, sublane)            # tiny pad only (sublane packing)
    tm_eff = min(tm, M_pad)
    # v7x megacore: give both TensorCores a row tile for medium-sized M.
    if M > 256 and pl.cdiv(M_pad, tm_eff) == 1:
        tm_eff = _round_up((M + 1) // 2, sublane)

    def vmem_est(tm_, th_):
        return (2 * tm_ * D_in * x_isz                        # x tile (2 bufs)
                + 2 * tm_ * D_out * x_isz                     # out tile
                + 2 * (D_in * th_ + th_ * D_out + th_ + D_out) * w_isz
                + tm_ * D_out * 4                             # f32 accumulator
                + tm_ * th_ * 4)                              # f32 gelu interm.

    # ---- hidden tiling: keep weights VMEM-resident when they fit -----------
    if hidden_tile is None and vmem_est(tm_eff, D_hid) <= budget:
        # Single hidden chunk => constant weight index maps => w1/b1/w2/b2 are
        # DMA'd from HBM exactly once for the whole kernel.
        th_eff = D_hid
    else:
        th_eff = hidden_tile if hidden_tile is not None else th
        th_eff = max(128, _round_up(min(th_eff, _round_up(D_hid, 128)), 128))
        while th_eff > 128 and vmem_est(tm_eff, th_eff) > budget:
            th_eff = max(128, (th_eff // 2 // 128) * 128)

    # Pad hidden dim so th_eff divides it exactly.  Zero padding is exact:
    # gelu(0 + 0) = 0 and the padded w2 rows are zero -> zero contribution.
    D_hid_eff = _round_up(D_hid, th_eff)
    if D_hid_eff != D_hid:
        w1 = jnp.pad(w1, ((0, 0), (0, D_hid_eff - D_hid)))
        b1 = jnp.pad(b1, ((0, D_hid_eff - D_hid),))
        w2 = jnp.pad(w2, ((0, D_hid_eff - D_hid), (0, 0)))

    # If still over budget (very wide D_in/D_out), shrink the row tile.
    while vmem_est(tm_eff, th_eff) > budget and tm_eff > 2 * sublane:
        tm_eff = _round_up(max(sublane, tm_eff // 2), sublane)

    if M_pad != M:
        x2d = jnp.pad(x2d, ((0, M_pad - M), (0, 0)))

    n_row_tiles = pl.cdiv(M_pad, tm_eff)
    n_hid_tiles = D_hid_eff // th_eff
    grid = (n_row_tiles, n_hid_tiles)

    b1_2d = b1.reshape(1, D_hid_eff)
    b2_2d = b2.reshape(1, D_out)

    # ---- cost estimate ------------------------------------------------------
    flops = 2 * M * (D_in * D_hid_eff + D_hid_eff * D_out)
    weight_bytes = (w1.size + w2.size + b1_2d.size + b2_2d.size) * w_isz
    weight_passes = 1 if n_hid_tiles == 1 else n_row_tiles
    bytes_accessed = int(x2d.size * x_isz + M_pad * D_out * x_isz
                         + weight_passes * weight_bytes)
    cost = pl.CostEstimate(flops=int(flops),
                           transcendentals=int(M * D_hid_eff),
                           bytes_accessed=bytes_accessed)

    out2d = pl.pallas_call(
        _mlp_kernel,
        out_shape=jax.ShapeDtypeStruct((M_pad, D_out), x.dtype),
        grid_spec=pltpu.PrefetchScalarGridSpec(
            num_scalar_prefetch=0,
            grid=grid,
            in_specs=[
                pl.BlockSpec((tm_eff, D_in), lambda i, h: (i, 0)),    # x tile
                pl.BlockSpec((D_in, th_eff), lambda i, h: (0, h)),    # w1 chunk
                pl.BlockSpec((1, th_eff), lambda i, h: (0, h)),       # b1 chunk
                pl.BlockSpec((th_eff, D_out), lambda i, h: (h, 0)),   # w2 chunk
                pl.BlockSpec((1, D_out), lambda i, h: (0, 0)),        # b2
            ],
            out_specs=pl.BlockSpec((tm_eff, D_out), lambda i, h: (i, 0)),
            scratch_shapes=[pltpu.VMEM((tm_eff, D_out), jnp.float32)],
        ),
        compiler_params=pltpu.CompilerParams(
            dimension_semantics=("parallel", "arbitrary"),
            vmem_limit_bytes=int(vmem_limit_bytes),
        ),
        cost_estimate=cost,
    )(x2d, w1, b1_2d, w2, b2_2d)

    if M_pad != M:
        out2d = out2d[:M]
    return out2d.reshape(*lead_shape, D_out)


def _ref_mlp(x, w1, b1, w2, b2):
    h = jax.nn.gelu(x @ w1 + b1, approximate=False)
    return h @ w2 + b2


if __name__ == "__main__":
    key = jax.random.PRNGKey(0)

    # ---- Case 1: module-default-like shapes (in=32, hidden=64, out=32) ----
    B, S, D_in, D_hid, D_out = 2, 8, 32, 64, 32
    kx, k1, k2, k3, k4, key = jax.random.split(key, 6)
    x = jax.random.normal(kx, (B, S, D_in), dtype=jnp.float32)
    bound1, bound2 = 1.0 / math.sqrt(D_in), 1.0 / math.sqrt(D_hid)
    w1 = jax.random.uniform(k1, (D_in, D_hid), jnp.float32, -bound1, bound1)
    b1 = jax.random.uniform(k2, (D_hid,), jnp.float32, -bound1, bound1)
    w2 = jax.random.uniform(k3, (D_hid, D_out), jnp.float32, -bound2, bound2)
    b2 = jax.random.uniform(k4, (D_out,), jnp.float32, -bound2, bound2)

    out = jax.block_until_ready(mlp_pallas(x, w1, b1, w2, b2))
    ref = _ref_mlp(x, w1, b1, w2, b2)
    assert out.shape == (B, S, D_out)
    assert jnp.allclose(out, ref, atol=2e-5, rtol=2e-5), "case-1 mismatch"

    # ---- Case 2: ragged rows (M=20) + non-128-multiple hidden dim (192) ----
    # hidden_tile=128 forces the streaming path: hidden is zero-padded to 256
    # and processed in 2 chunks with f32 scratch accumulation.
    B2, S2, D_in2, D_hid2, D_out2 = 2, 10, 128, 192, 128
    kx, k1, k2, k3, k4, key = jax.random.split(key, 6)
    x2 = jax.random.normal(kx, (B2, S2, D_in2), dtype=jnp.float32)
    bound1, bound2 = 1.0 / math.sqrt(D_in2), 1.0 / math.sqrt(D_hid2)
    w1b = jax.random.uniform(k1, (D_in2, D_hid2), jnp.float32, -bound1, bound1)
    b1b = jax.random.uniform(k2, (D_hid2,), jnp.float32, -bound1, bound1)
    w2b = jax.random.uniform(k3, (D_hid2, D_out2), jnp.float32, -bound2, bound2)
    b2b = jax.random.uniform(k4, (D_out2,), jnp.float32, -bound2, bound2)

    out2 = jax.block_until_ready(
        mlp_pallas(x2, w1b, b1b, w2b, b2b, hidden_tile=128))
    ref2 = _ref_mlp(x2, w1b, b1b, w2b, b2b)
    assert out2.shape == (B2, S2, D_out2)
    assert jnp.allclose(out2, ref2, atol=2e-4, rtol=2e-4), "case-2 mismatch"

    print("KERNEL_OK")
</pallas_src>

<mosaic_0001>
module attributes {stable_mosaic.version = 11 : i64} {
  func.func @_mlp_kernel(%arg0: i32, %arg1: i32, %arg2: memref<16x32xf32, #tpu.memory_space<vmem>>, %arg3: memref<32x64xf32, #tpu.memory_space<vmem>>, %arg4: memref<1x64xf32, #tpu.memory_space<vmem>>, %arg5: memref<64x32xf32, #tpu.memory_space<vmem>>, %arg6: memref<1x32xf32, #tpu.memory_space<vmem>>, %arg7: memref<16x32xf32, #tpu.memory_space<vmem>>, %arg8: memref<16x32xf32, #tpu.memory_space<vmem>>) attributes {dimension_semantics = [#tpu.dimension_semantics<parallel>, #tpu.dimension_semantics<arbitrary>], iteration_bounds = array<i64: 1, 1>, scalar_prefetch = 0 : i64, scratch_operands = 1 : i64, tpu.core_type = #tpu.core_type<tc>, window_params = [{transform_indices = @transform_0, window_bounds = array<i64: 16, 32>}, {transform_indices = @transform_1, window_bounds = array<i64: 32, 64>}, {transform_indices = @transform_2, window_bounds = array<i64: 1, 64>}, {transform_indices = @transform_3, window_bounds = array<i64: 64, 32>}, {pipeline_mode = #tpu.pipeline_mode<synchronous>, transform_indices = @transform_4, window_bounds = array<i64: 1, 32>}, {transform_indices = @transform_5, window_bounds = array<i64: 16, 32>}]} {
    %c0_i32 = arith.constant 0 : i32
    %0 = arith.cmpi eq, %arg1, %c0_i32 : i32
    %1 = arith.extui %0 : i1 to i32
    %c0_i32_0 = arith.constant 0 : i32
    %2 = arith.cmpi ne, %1, %c0_i32_0 : i32
    scf.if %2 {
      %c0_18 = arith.constant 0 : index
      %c0_19 = arith.constant 0 : index
      %25 = vector.load %arg6[%c0_18, %c0_19] : memref<1x32xf32, #tpu.memory_space<vmem>>, vector<1x32xf32>
      %26 = vector.shape_cast %25 : vector<1x32xf32> to vector<1x32xf32>
      %27 = vector.broadcast %26 : vector<1x32xf32> to vector<16x32xf32>
      %c0_20 = arith.constant 0 : index
      %c0_21 = arith.constant 0 : index
      %28 = vector.load %arg8[%c0_20, %c0_21] : memref<16x32xf32, #tpu.memory_space<vmem>>, vector<16x32xf32>
      tpu.vector_store %arg8[%c0_20, %c0_21], %27 {strides = array<i32>} : memref<16x32xf32, #tpu.memory_space<vmem>>, vector<16x32xf32>,
    } else {
    }
    %c0 = arith.constant 0 : index
    %c0_1 = arith.constant 0 : index
    %3 = vector.load %arg2[%c0, %c0_1] : memref<16x32xf32, #tpu.memory_space<vmem>>, vector<16x32xf32>
    %c0_2 = arith.constant 0 : index
    %c0_3 = arith.constant 0 : index
    %4 = vector.load %arg3[%c0_2, %c0_3] : memref<32x64xf32, #tpu.memory_space<vmem>>, vector<32x64xf32>
    %cst = arith.constant dense<0.000000e+00> : vector<16x64xf32>
    %5 = tpu.matmul %3, %4, %cst {dimension_numbers = #tpu.dot_dimension_numbers<[1], [0], [0], [1], [0, 0, 1, 1], [], []>} : vector<16x32xf32>, vector<32x64xf32>, vector<16x64xf32> -> vector<16x64xf32>
    %c0_4 = arith.constant 0 : index
    %c0_5 = arith.constant 0 : index
    %6 = vector.load %arg4[%c0_4, %c0_5] : memref<1x64xf32, #tpu.memory_space<vmem>>, vector<1x64xf32>
    %7 = vector.broadcast %6 : vector<1x64xf32> to vector<16x64xf32>
    %8 = arith.addf %5, %7 : vector<16x64xf32>
    %cst_6 = arith.constant 5.000000e-01 : f32
    %9 = vector.broadcast %cst_6 : f32 to vector<16x64xf32>
    %10 = arith.mulf %9, %8 : vector<16x64xf32>
    %cst_7 = arith.constant 0.707106769 : f32
    %11 = vector.broadcast %cst_7 : f32 to vector<16x64xf32>
    %12 = arith.mulf %8, %11 : vector<16x64xf32>
    %13 = math.erf %12 : vector<16x64xf32>
    %cst_8 = arith.constant 1.000000e+00 : f32
    %14 = vector.broadcast %cst_8 : f32 to vector<16x64xf32>
    %15 = arith.addf %14, %13 : vector<16x64xf32>
    %16 = arith.mulf %10, %15 : vector<16x64xf32>
    %c0_9 = arith.constant 0 : index
    %c0_10 = arith.constant 0 : index
    %17 = vector.load %arg8[%c0_9, %c0_10] : memref<16x32xf32, #tpu.memory_space<vmem>>, vector<16x32xf32>
    %c0_11 = arith.constant 0 : index
    %c0_12 = arith.constant 0 : index
    %18 = vector.load %arg5[%c0_11, %c0_12] : memref<64x32xf32, #tpu.memory_space<vmem>>, vector<64x32xf32>
    %cst_13 = arith.constant dense<0.000000e+00> : vector<16x32xf32>
    %19 = tpu.matmul %16, %18, %cst_13 {dimension_numbers = #tpu.dot_dimension_numbers<[1], [0], [0], [1], [0, 0, 1, 1], [], []>} : vector<16x64xf32>, vector<64x32xf32>, vector<16x32xf32> -> vector<16x32xf32>
    %20 = arith.addf %17, %19 : vector<16x32xf32>
    %c0_14 = arith.constant 0 : index
    %c0_15 = arith.constant 0 : index
    %21 = vector.load %arg8[%c0_14, %c0_15] : memref<16x32xf32, #tpu.memory_space<vmem>>, vector<16x32xf32>
    tpu.vector_store %arg8[%c0_14, %c0_15], %20 {strides = array<i32>} : memref<16x32xf32, #tpu.memory_space<vmem>>, vector<16x32xf32>,
    %c0_i32_16 = arith.constant 0 : i32
    %22 = arith.cmpi eq, %arg1, %c0_i32_16 : i32
    %23 = arith.extui %22 : i1 to i32
    %c0_i32_17 = arith.constant 0 : i32
    %24 = arith.cmpi ne, %23, %c0_i32_17 : i32
    scf.if %24 {
      %c0_18 = arith.constant 0 : index
      %c0_19 = arith.constant 0 : index
      %25 = vector.load %arg8[%c0_18, %c0_19] : memref<16x32xf32, #tpu.memory_space<vmem>>, vector<16x32xf32>
      %c0_20 = arith.constant 0 : index
      %c0_21 = arith.constant 0 : index
      %26 = vector.load %arg7[%c0_20, %c0_21] : memref<16x32xf32, #tpu.memory_space<vmem>>, vector<16x32xf32>
      tpu.vector_store %arg7[%c0_20, %c0_21], %25 {strides = array<i32>} : memref<16x32xf32, #tpu.memory_space<vmem>>, vector<16x32xf32>,
    } else {
    }
    return
  }
  func.func @transform_0(%arg0: i32, %arg1: i32) -> (i32, i32) {
    %c0_i32 = arith.constant 0 : i32
    %c0_i32_0 = arith.constant 0 : i32
    return %arg0, %c0_i32 : i32, i32
  }
  func.func @transform_1(%arg0: i32, %arg1: i32) -> (i32, i32) {
    %c0_i32 = arith.constant 0 : i32
    %c0_i32_0 = arith.constant 0 : i32
    return %c0_i32, %arg1 : i32, i32
  }
  func.func @transform_2(%arg0: i32, %arg1: i32) -> (i32, i32) {
    %c0_i32 = arith.constant 0 : i32
    %c0_i32_0 = arith.constant 0 : i32
    return %c0_i32, %arg1 : i32, i32
  }
  func.func @transform_3(%arg0: i32, %arg1: i32) -> (i32, i32) {
    %c0_i32 = arith.constant 0 : i32
    %c0_i32_0 = arith.constant 0 : i32
    return %arg1, %c0_i32 : i32, i32
  }
  func.func @transform_4(%arg0: i32, %arg1: i32) -> (i32, i32) {
    %c0_i32 = arith.constant 0 : i32
    %c0_i32_0 = arith.constant 0 : i32
    %c0_i32_1 = arith.constant 0 : i32
    return %c0_i32, %c0_i32_0 : i32, i32
  }
  func.func @transform_5(%arg0: i32, %arg1: i32) -> (i32, i32) {
    %c0_i32 = arith.constant 0 : i32
    %c0_i32_0 = arith.constant 0 : i32
    return %arg0, %c0_i32 : i32, i32
  }
}

</mosaic_0001>

<llo_original>
// kernel: tpu_custom_call.1
$region0: #{tpu_custom_call.1}
  #allocation0 [shape = 'u32[]', space=smem, size = 0x4, offset = 0x4, fixed_abs, tag = 'smem constant byte address 0x4 - core index']
  #allocation1 [shape = 'u32[144,128]{1,0:T(1,128)}', space=vmem, size = 0x12000, scoped, tag = 'internal scratch']
  #allocation2 [shape = 'f32[16,32]{1,0:T(8,128)}', space=vmem, size = 0x2000, scoped, tag = 'scratch operand']
  %s0 = inlined_call_operand.vmem [shape: f32[16,32], index: 0, kind: input, shape index: {}]
  %s1 = inlined_call_operand.vmem [shape: f32[32,64], index: 1, kind: input, shape index: {}]
  %s2 = inlined_call_operand.vmem [shape: f32[1,64], index: 2, kind: input, shape index: {}]
  %s3 = inlined_call_operand.vmem [shape: f32[64,32], index: 3, kind: input, shape index: {}]
  %s4 = inlined_call_operand.vmem [shape: f32[1,32], index: 4, kind: input, shape index: {}]
  %s5 = inlined_call_operand.hbm [shape: f32[16,32], index: 5, kind: output, shape index: {}]
  %s6 = sld [smem:[#allocation0]]
  $region38: #{tpu_custom_call.1} parent=0
    _
  %s8 = ssub.s32 1, %s6
  %s9 = scalar_select 0, %s8, %s6
  $region1: #{tpu_custom_call.1} parent=0
    #allocation3 [shape = 'u8[8192]{0}', space=vmem, size = 0x2000, scoped, tag = 'output window, operand 0, single buffered']
    #allocation4 [shape = 's32[1]{0}', space=sflag, size = 0x4, scoped, tag = 'scoped memory for tpu_custom_call.1']
    %10 = vsyncpa [#allocation4], 0
    // Predicated region
    $region2: #{tpu_custom_call.1} parent=1 // pred_check
      _
    $region3: #{tpu_custom_call.1} parent=1 // pred_check_branch
      %12 = sbr.rel (0) target = $region5
    $region4: #{tpu_custom_call.1} parent=1 // pred_region
      _
    $region5: #{tpu_custom_call.1} parent=1 // pred_fallthru
      _
    // Predicated region
    $region6: #{tpu_custom_call.1} parent=1 // pred_check
      _
    $region7: #{tpu_custom_call.1} parent=1 // pred_check_branch
      %14 = sbr.rel (0) target = $region9
    $region8: #{tpu_custom_call.1} parent=1 // pred_region
      _
    $region9: #{tpu_custom_call.1} parent=1 // pred_fallthru
      _
    // Predicated region
    $region10: #{tpu_custom_call.1} parent=1 // pred_check
      _
    $region11: #{tpu_custom_call.1} parent=1 // pred_check_branch
      %16 = sbr.rel (0) target = $region13
    $region12: #{tpu_custom_call.1} parent=1 // pred_region
      _
    $region13: #{tpu_custom_call.1} parent=1 // pred_fallthru
      _
    // Predicated region
    $region14: #{tpu_custom_call.1} parent=1 // pred_check
      _
    $region15: #{tpu_custom_call.1} parent=1 // pred_check_branch
      %18 = sbr.rel (0) target = $region17
    $region16: #{tpu_custom_call.1} parent=1 // pred_region
      _
    $region17: #{tpu_custom_call.1} parent=1 // pred_fallthru
      _
    // Predicated region
    $region18: #{tpu_custom_call.1} parent=1 // pred_check
      _
    $region19: #{tpu_custom_call.1} parent=1 // pred_check_branch
      %20 = sbr.rel (0) target = $region21
    $region20: #{tpu_custom_call.1} parent=1 // pred_region
      _
    $region21: #{tpu_custom_call.1} parent=1 // pred_fallthru
      _
    %p21 = scmp.eq.s32.totalorder 0, 0
    // Predicated region
    $region22: #{tpu_custom_call.1} parent=1 // pred_check
      %p22 = pneg %p21
    $region23: #{tpu_custom_call.1} parent=1 // pred_check_branch
      %24 = sbr.rel (%p22) target = $region25
    $region24: #{tpu_custom_call.1} parent=1 // pred_region
      %v25 = vld [vmem:[%s4] sm:$0x1]
      %v27 = vlaneseq
      %v28 = vshrl.u32 %v27, 7
      %v29 = vsub.s32 0, %v28
      %v30 = vrot.slane %v25, %v29
      %vm32 = vcmask 261120
      %33 = vst.msk [vmem:[#allocation2] sm:$0xff] %vm32, %v30
      %34 = vst.msk [vmem:[#allocation2 + $0x8] sm:$0xff] %vm32, %v30
    $region25: #{tpu_custom_call.1} parent=1 // pred_fallthru
      _
    %v35 = vld [vmem:[%s0] sm:$0xff]
    %v36 = vld [vmem:[%s0 + $0x8] sm:$0xff]
    %v37 = vld [vmem:[%s1] sm:$0xff]
    %v38 = vld [vmem:[%s1 + $0x8] sm:$0xff]
    %v39 = vld [vmem:[%s1 + $0x10] sm:$0xff]
    %v40 = vld [vmem:[%s1 + $0x18] sm:$0xff]
    %v41 = vld [vmem:[%s2] sm:$0x1]
    %v43 = vlaneseq
    %v44 = vshrl.u32 %v43, 7
    %v45 = vsub.s32 0, %v44
    %v46 = vrot.slane %v41, %v45
    %vm48 = vcmask 261120
    %v50 = vsel %vm48, %v35, 0
    %v53 = vsel %vm48, %v36, 0
    %55 = vmatprep.subr.mxu0 0.0
    %56 = vmatpush1.msra.mxu0 %v37
    %57 = vmatprep.subr.mxu0 0.0
    %58 = vmatpush1.msra.mxu0 %v38
    %59 = vmatprep.subr.mxu0 0.0
    %60 = vmatpush1.msra.mxu0 %v39
    %61 = vmatprep.subr.mxu0 0.0
    %62 = vmatpush1.msra.mxu0 %v40
    %63 = vmatprep.subr.mxu0 0.0
    %64 = vmatpush1.msra.mxu0 0.0
    %65 = vmatprep.subr.mxu0 0.0
    %66 = vmatpush1.msra.mxu0 0.0
    %67 = vmatprep.subr.mxu0 0.0
    %68 = vmatpush1.msra.mxu0 0.0
    %69 = vmatprep.subr.mxu0 0.0
    %70 = vmatpush1.msra.mxu0 0.0
    %71 = vmatprep.subr.mxu0 0.0
    %72 = vmatpush1.msra.mxu0 0.0
    %73 = vmatprep.subr.mxu0 0.0
    %74 = vmatpush1.msra.mxu0 0.0
    %75 = vmatprep.subr.mxu0 0.0
    %76 = vmatpush1.msra.mxu0 0.0
    %77 = vmatprep.subr.mxu0 0.0
    %78 = vmatpush1.msra.mxu0 0.0
    %79 = vmatprep.subr.mxu0 0.0
    %80 = vmatpush1.msra.mxu0 0.0
    %81 = vmatprep.subr.mxu0 0.0
    %82 = vmatpush1.msra.mxu0 0.0
    %83 = vmatprep.subr.mxu0 0.0
    %84 = vmatpush1.msra.mxu0 0.0
    %85 = vmatprep.subr.mxu0 0.0
    %86 = vmatpush1.msra.mxu0 0.0
    %87 = vmatprep.subr.mxu0 0.0
    %88 = vmatpush1.msra.mxu0 0.0
    %89 = vmatprep.subr.mxu0 0.0
    %90 = vmatpush1.msra.mxu0 0.0
    %91 = vmatprep.subr.mxu0 0.0
    %92 = vmatpush1.msra.mxu0 0.0
    %93 = vmatprep.subr.mxu0 0.0
    %94 = vmatpush1.msra.mxu0 0.0
    %95 = vmatprep.subr.mxu0 0.0
    %96 = vmatpush1.msra.mxu0 0.0
    %97 = vmatprep.subr.mxu0 0.0
    %98 = vmatpush1.msra.mxu0 0.0
    %99 = vmatprep.subr.mxu0 0.0
    %100 = vmatpush1.msra.mxu0 0.0
    %101 = vmatprep.subr.mxu0 0.0
    %102 = vmatpush1.msra.mxu0 0.0
    %103 = vmatprep.subr.mxu0 0.0
    %104 = vmatpush1.msra.mxu0 0.0
    %105 = vmatprep.subr.mxu0 0.0
    %106 = vmatpush1.msra.mxu0 0.0
    %107 = vmatprep.subr.mxu0 0.0
    %108 = vmatpush1.msra.mxu0 0.0
    %109 = vmatprep.subr.mxu0 0.0
    %110 = vmatpush1.msra.mxu0 0.0
    %111 = vmatprep.subr.mxu0 0.0
    %112 = vmatpush1.msra.mxu0 0.0
    %113 = vmatprep.subr.mxu0 0.0
    %114 = vmatpush1.msra.mxu0 0.0
    %115 = vmatprep.subr.mxu0 0.0
    %116 = vmatpush1.msra.mxu0 0.0
    %117 = vmatprep.subr.mxu0 0.0
    %118 = vmatpush1.msra.mxu0 0.0
    %119 = vmatprep.mubr.f32.mxu0 0.0
    %120 = vmatmul.mubr.f32.gmra.mrb[0].mxu0 %v50
    %v121 = vpop.f32.mrb[0].mxu0
    %v122 = vadd.f32 %v46, %v121
    %v123 = vpop.f32.mrb[0].mxu0
    %124 = vmatprep.mubr.f32.mxu0 0.0
    %125 = vmatmul.mubr.f32.gmra.mrb[0].mxu0 %v53
    %v126 = vpop.f32.mrb[0].mxu0
    %v127 = vadd.f32 %v46, %v126
    %v128 = vpop.f32.mrb[0].mxu0
    %129 = vdwg.mxu0
    %v130 = vmul.f32 %v122, 0.5
    %v131 = vmul.f32 %v127, 0.5
    %v132 = vmul.f32 %v122, 0.70710677
    %v133 = vmul.f32 %v127, 0.70710677
    %v134 = verf.f32.pop %v132
    %v135 = verf.f32.pop %v133
    %v136 = vadd.f32 %v134, 1.0
    %v137 = vadd.f32 %v135, 1.0
    %v138 = vmul.f32 %v130, %v136
    %v139 = vmul.f32 %v131, %v137
    %v140 = vld [vmem:[#allocation2] sm:$0xff]
    %v141 = vld [vmem:[#allocation2 + $0x8] sm:$0xff]
    %v142 = vld [vmem:[%s3] sm:$0xff]
    %v143 = vld [vmem:[%s3 + $0x8] sm:$0xff]
    %v144 = vld [vmem:[%s3 + $0x10] sm:$0xff]
    %v145 = vld [vmem:[%s3 + $0x18] sm:$0xff]
    %v146 = vld [vmem:[%s3 + $0x20] sm:$0xff]
    %v147 = vld [vmem:[%s3 + $0x28] sm:$0xff]
    %v148 = vld [vmem:[%s3 + $0x30] sm:$0xff]
    %v149 = vld [vmem:[%s3 + $0x38] sm:$0xff]
    %vm150 = vcmask 523264
    %v152 = vsel %vm150, %v138, 0
    %v155 = vsel %vm150, %v139, 0
    %157 = vmatprep.subr.mxu0 0.0
    %158 = vmatpush1.msra.mxu0 %v142
    %159 = vmatprep.subr.mxu0 0.0
    %160 = vmatpush1.msra.mxu0 %v143
    %161 = vmatprep.subr.mxu0 0.0
    %162 = vmatpush1.msra.mxu0 %v144
    %163 = vmatprep.subr.mxu0 0.0
    %164 = vmatpush1.msra.mxu0 %v145
    %165 = vmatprep.subr.mxu0 0.0
    %166 = vmatpush1.msra.mxu0 %v146
    %167 = vmatprep.subr.mxu0 0.0
    %168 = vmatpush1.msra.mxu0 %v147
    %169 = vmatprep.subr.mxu0 0.0
    %170 = vmatpush1.msra.mxu0 %v148
    %171 = vmatprep.subr.mxu0 0.0
    %172 = vmatpush1.msra.mxu0 %v149
    %173 = vmatprep.subr.mxu0 0.0
    %174 = vmatpush1.msra.mxu0 0.0
    %175 = vmatprep.subr.mxu0 0.0
    %176 = vmatpush1.msra.mxu0 0.0
    %177 = vmatprep.subr.mxu0 0.0
    %178 = vmatpush1.msra.mxu0 0.0
    %179 = vmatprep.subr.mxu0 0.0
    %180 = vmatpush1.msra.mxu0 0.0
    %181 = vmatprep.subr.mxu0 0.0
    %182 = vmatpush1.msra.mxu0 0.0
    %183 = vmatprep.subr.mxu0 0.0
    %184 = vmatpush1.msra.mxu0 0.0
    %185 = vmatprep.subr.mxu0 0.0
    %186 = vmatpush1.msra.mxu0 0.0
    %187 = vmatprep.subr.mxu0 0.0
    %188 = vmatpush1.msra.mxu0 0.0
    %189 = vmatprep.subr.mxu0 0.0
    %190 = vmatpush1.msra.mxu0 0.0
    %191 = vmatprep.subr.mxu0 0.0
    %192 = vmatpush1.msra.mxu0 0.0
    %193 = vmatprep.subr.mxu0 0.0
    %194 = vmatpush1.msra.mxu0 0.0
    %195 = vmatprep.subr.mxu0 0.0
    %196 = vmatpush1.msra.mxu0 0.0
    %197 = vmatprep.subr.mxu0 0.0
    %198 = vmatpush1.msra.mxu0 0.0
    %199 = vmatprep.subr.mxu0 0.0
    %200 = vmatpush1.msra.mxu0 0.0
    %201 = vmatprep.subr.mxu0 0.0
    %202 = vmatpush1.msra.mxu0 0.0
    %203 = vmatprep.subr.mxu0 0.0
    %204 = vmatpush1.msra.mxu0 0.0
    %205 = vmatprep.subr.mxu0 0.0
    %206 = vmatpush1.msra.mxu0 0.0
    %207 = vmatprep.subr.mxu0 0.0
    %208 = vmatpush1.msra.mxu0 0.0
    %209 = vmatprep.subr.mxu0 0.0
    %210 = vmatpush1.msra.mxu0 0.0
    %211 = vmatprep.subr.mxu0 0.0
    %212 = vmatpush1.msra.mxu0 0.0
    %213 = vmatprep.subr.mxu0 0.0
    %214 = vmatpush1.msra.mxu0 0.0
    %215 = vmatprep.subr.mxu0 0.0
    %216 = vmatpush1.msra.mxu0 0.0
    %217 = vmatprep.subr.mxu0 0.0
    %218 = vmatpush1.msra.mxu0 0.0
    %219 = vmatprep.subr.mxu0 0.0
    %220 = vmatpush1.msra.mxu0 0.0
    %221 = vmatprep.mubr.f32.mxu0 0.0
    %222 = vmatmul.mubr.f32.gmra.mrb[0].mxu0 %v152
    %v223 = vpop.f32.mrb[0].mxu0
    %v224 = vadd.f32 0.0, %v223
    %v225 = vpop.f32.mrb[0].mxu0
    %226 = vmatprep.mubr.f32.mxu0 0.0
    %227 = vmatmul.mubr.f32.gmra.mrb[0].mxu0 %v155
    %v228 = vpop.f32.mrb[0].mxu0
    %v229 = vadd.f32 0.0, %v228
    %v230 = vpop.f32.mrb[0].mxu0
    %231 = vdwg.mxu0
    %v232 = vadd.f32 %v140, %v224
    %v233 = vadd.f32 %v141, %v229
    %234 = vst.msk [vmem:[#allocation2] sm:$0xff] %vm48, %v232
    %235 = vst.msk [vmem:[#allocation2 + $0x8] sm:$0xff] %vm48, %v233
    // Predicated region
    $region26: #{tpu_custom_call.1} parent=1 // pred_check
      %p236 = pneg %p21
    $region27: #{tpu_custom_call.1} parent=1 // pred_check_branch
      %238 = sbr.rel (%p236) target = $region29
    $region28: #{tpu_custom_call.1} parent=1 // pred_region
      %v239 = vld [vmem:[#allocation2] sm:$0xff]
      %v240 = vld [vmem:[#allocation2 + $0x8] sm:$0xff]
      %241 = vst.msk [vmem:[#allocation3] sm:$0xff] %vm48, %v239
      %242 = vst.msk [vmem:[#allocation3 + $0x8] sm:$0xff] %vm48, %v240
    $region29: #{tpu_custom_call.1} parent=1 // pred_fallthru
      _
    // Predicated region
    $region30: #{tpu_custom_call.1} parent=1 // pred_check
      _
    $region31: #{tpu_custom_call.1} parent=1 // pred_check_branch
      %244 = sbr.rel (0) target = $region33
    $region32: #{tpu_custom_call.1} parent=1 // pred_region
      %s246 = ssub.s32 256, 256
      %247 = vsyncadd [#allocation4], %s246
      %s248 = sshll.u32 [#allocation3], 4
      %s249 = int_to_ptr.vmem [resolvable:$true] %s248
      %254 = dma.vmem_to_hbm [thread:$0]  %s249, 256, %s5, [#allocation4], 128, 128, 8
    $region33: #{tpu_custom_call.1} parent=1 // pred_fallthru
      _
    // Predicated region
    $region34: #{tpu_custom_call.1} parent=1 // pred_check
      _
    $region35: #{tpu_custom_call.1} parent=1 // pred_check_branch
      %256 = sbr.rel (0) target = $region37
    $region36: #{tpu_custom_call.1} parent=1 // pred_region
      %257 = dma.done [#allocation4], 256
    $region37: #{tpu_custom_call.1} parent=1 // pred_fallthru
      _
    %258 = vsyncpa [#allocation4], 1

</llo_original>
